<compile_context>
chip_gen: v5e
topology: v5e:2x2
jax: 0.10.0
libtpu: 0.0.40
codegen_flags: <defaults>
</compile_context>

<pallas_src>
import jax
import jax.numpy as jnp
from jax.experimental import pallas as pl
from jax.experimental.pallas import tpu as pltpu


def _round_up(x, m):
    return (x + m - 1) // m * m


def _vmem_capacity_bytes():
    try:
        return int(pltpu.get_tpu_info().vmem_capacity_bytes)
    except Exception:
        return 64 << 20  # conservative fallback: v7x per-core VMEM


def _choose_tile_m(M, target_rows):
    """Row-tile size.  Prefer an exact divisor of M (no ragged block, no pad),
    a multiple of 16 when splitting (bf16 sublane packing), and an even grid
    so megacore parts balance both TensorCores."""
    target = max(int(target_rows), 16)
    if M <= target:
        return M  # one full block (block == full array dim is always legal)
    limit = target - target % 16
    best = None
    best_even = None
    for d in range(limit, 15, -16):
        if M % d == 0:
            if best is None:
                best = d
            if (M // d) % 2 == 0:  # even grid -> both TCs get equal work
                best_even = d
                break
    if best_even is not None and 2 * best_even >= (best or 0):
        return best_even
    if best is not None:
        return best
    return limit  # ragged last block; Pallas masks the out-of-range rows


def _patch_embed_kernel(x_ref, w_ref, b_ref, o_ref):
    # x_ref: (TILE_M, K_pad) bf16   flattened patches
    # w_ref: (K_pad, E_pad)  bf16   conv weight reshaped (VMEM-resident)
    # b_ref: (1, E_pad)      f32    conv bias
    # o_ref: (TILE_M, E_pad) out_dtype
    acc = jnp.dot(x_ref[...], w_ref[...], preferred_element_type=jnp.float32)
    o_ref[...] = (acc + b_ref[...]).astype(o_ref.dtype)


def prepare_patch_embedding_params(weight, bias):
    """Reshape / cast / pad Conv2d params once (hoist out of the per-call path)."""
    E, C, P, _ = weight.shape
    K = C * P * P
    K_pad = _round_up(K, 16)
    E_pad = _round_up(E, 128)
    w2d = weight.reshape(E, K).T.astype(jnp.bfloat16)  # (K, E), (c,ph,pw) order
    if (K_pad, E_pad) != (K, E):
        w2d = jnp.pad(w2d, ((0, K_pad - K), (0, E_pad - E)))
    b2d = bias.astype(jnp.float32).reshape(1, E)
    if E_pad != E:
        b2d = jnp.pad(b2d, ((0, 0), (0, E_pad - E)))
    return w2d, b2d


def patch_embedding(x, weight, bias, patch_size, out_dtype=jnp.float32, params=None):
    """x: (B, C, H, W) NCHW; weight: (E, C, P, P); bias: (E,) -> (B, N, E)."""
    B, C, H, W = x.shape
    E = weight.shape[0]
    P = patch_size
    Gh, Gw = H // P, W // P
    num_patches = Gh * Gw
    K = C * P * P
    K_pad = _round_up(K, 16)
    E_pad = _round_up(E, 128)

    w2d, b2d = params if params is not None else prepare_patch_embedding_params(weight, bias)

    # ---- layout glue: bf16 cast first (halves the materialized copy), then
    #      patch extraction in (C, ph, pw) order to match the Conv2d weight. ----
    xb = x.astype(jnp.bfloat16)
    xp = xb.reshape(B, C, Gh, P, Gw, P)
    xp = jnp.transpose(xp, (0, 2, 4, 1, 3, 5))          # (B, Gh, Gw, C, P, P)
    xp = xp.reshape(B * num_patches, K)                  # (M, K) bf16
    if K_pad != K:
        # Rare (only when C*P*P is not 16-aligned); keeps K packing-dense.
        xp = jnp.pad(xp, ((0, 0), (0, K_pad - K)))

    M = B * num_patches
    out_isize = jnp.dtype(out_dtype).itemsize

    # ---- VMEM budget -> generation-aware row tile ----
    usable = int(_vmem_capacity_bytes() * 0.8)           # headroom for Mosaic scratch
    resident = 2 * (K_pad * E_pad * 2 + E_pad * 4)       # weight + bias (conservative 2x)
    row_bytes = 2 * (K_pad * 2 + E_pad * out_isize)      # double-buffered in/out rows
    target_rows = max((usable - resident) // row_bytes, 16)
    target_rows = min(target_rows, 2048)                 # diminishing returns past ~2k rows
    TILE_M = _choose_tile_m(M, target_rows)
    grid_m = pl.cdiv(M, TILE_M)

    need = resident + TILE_M * row_bytes
    vmem_limit = int(min(max(need + (4 << 20), 32 << 20), max(usable, 32 << 20)))

    cost = pl.CostEstimate(
        flops=2 * M * K_pad * E_pad,
        bytes_accessed=(M * K_pad * 2 + K_pad * E_pad * 2 + E_pad * 4
                        + M * E_pad * out_isize),
        transcendentals=0,
    )

    out = pl.pallas_call(
        _patch_embed_kernel,
        out_shape=jax.ShapeDtypeStruct((M, E_pad), out_dtype),
        grid=(grid_m,),
        in_specs=[
            pl.BlockSpec((TILE_M, K_pad), lambda i: (i, 0)),
            pl.BlockSpec((K_pad, E_pad), lambda i: (0, 0)),   # weight: VMEM-resident
            pl.BlockSpec((1, E_pad), lambda i: (0, 0)),       # bias:   VMEM-resident
        ],
        out_specs=pl.BlockSpec((TILE_M, E_pad), lambda i: (i, 0)),
        compiler_params=pltpu.CompilerParams(
            dimension_semantics=("parallel",),
            vmem_limit_bytes=vmem_limit,
        ),
        cost_estimate=cost,
    )(xp, w2d, b2d)

    # No M slice: TILE_M either divides M exactly or the ragged block is masked
    # by Pallas.  E slice only when E is not already 128-aligned (tiny configs).
    if E_pad != E:
        out = out[:, :E]
    return out.reshape(B, num_patches, E)


if __name__ == "__main__":
    # Small config consistent with the module: patch_size=4, emb_size=32,
    # img_size=16, channels=4  => grid_size=4, num_patches=16.
    B, C, H, W = 2, 4, 16, 16
    P, E = 4, 32

    key = jax.random.PRNGKey(0)
    kx, kw, kb = jax.random.split(key, 3)
    x = jax.random.normal(kx, (B, C, H, W), dtype=jnp.float32)
    # Deterministic parameter init (synthetic, not a checkpoint).
    weight = jax.random.normal(kw, (E, C, P, P), dtype=jnp.float32) * 0.02
    bias = jax.random.normal(kb, (E,), dtype=jnp.float32) * 0.02

    # Hoist the parameter prep (would be cached at load time in a real model).
    params = prepare_patch_embedding_params(weight, bias)
    out = patch_embedding(x, weight, bias, P, out_dtype=jnp.float32, params=params)
    jax.block_until_ready(out)

    # Sanity check against pure-JAX fp32 reference (conv as patch matmul).
    # bf16 inputs with f32 accumulation => loose-ish tolerance.
    xp = x.reshape(B, C, H // P, P, W // P, P)
    xp = jnp.transpose(xp, (0, 2, 4, 1, 3, 5)).reshape(
        B * (H // P) * (W // P), C * P * P)
    ref = (xp @ weight.reshape(E, -1).T + bias).reshape(
        B, (H // P) * (W // P), E)
    assert out.shape == (B, (H // P) * (W // P), E)
    assert out.dtype == jnp.float32
    assert jnp.allclose(out, ref, atol=3e-2, rtol=3e-2)

    print("KERNEL_OK")
</pallas_src>

<mosaic_0001>
module attributes {stable_mosaic.version = 11 : i64} {
  func.func @_patch_embed_kernel(%arg0: i32, %arg1: memref<32x64xbf16, #tpu.memory_space<vmem>>, %arg2: memref<64x128xbf16, #tpu.memory_space<vmem>>, %arg3: memref<1x128xf32, #tpu.memory_space<vmem>>, %arg4: memref<32x128xf32, #tpu.memory_space<vmem>>) attributes {dimension_semantics = [#tpu.dimension_semantics<parallel>], iteration_bounds = array<i64: 1>, scalar_prefetch = 0 : i64, scratch_operands = 0 : i64, tpu.core_type = #tpu.core_type<tc>, window_params = [{transform_indices = @transform_0, window_bounds = array<i64: 32, 64>}, {pipeline_mode = #tpu.pipeline_mode<synchronous>, transform_indices = @transform_1, window_bounds = array<i64: 64, 128>}, {pipeline_mode = #tpu.pipeline_mode<synchronous>, transform_indices = @transform_2, window_bounds = array<i64: 1, 128>}, {transform_indices = @transform_3, window_bounds = array<i64: 32, 128>}]} {
    %c0 = arith.constant 0 : index
    %c0_0 = arith.constant 0 : index
    %0 = vector.load %arg1[%c0, %c0_0] : memref<32x64xbf16, #tpu.memory_space<vmem>>, vector<32x64xbf16>
    %c0_1 = arith.constant 0 : index
    %c0_2 = arith.constant 0 : index
    %1 = vector.load %arg2[%c0_1, %c0_2] : memref<64x128xbf16, #tpu.memory_space<vmem>>, vector<64x128xbf16>
    %cst = arith.constant dense<0.000000e+00> : vector<32x128xf32>
    %2 = tpu.matmul %0, %1, %cst {dimension_numbers = #tpu.dot_dimension_numbers<[1], [0], [0], [1], [0, 0, 1, 1], [], []>} : vector<32x64xbf16>, vector<64x128xbf16>, vector<32x128xf32> -> vector<32x128xf32>
    %c0_3 = arith.constant 0 : index
    %c0_4 = arith.constant 0 : index
    %3 = vector.load %arg3[%c0_3, %c0_4] : memref<1x128xf32, #tpu.memory_space<vmem>>, vector<1x128xf32>
    %4 = vector.broadcast %3 : vector<1x128xf32> to vector<32x128xf32>
    %5 = arith.addf %2, %4 : vector<32x128xf32>
    %c0_5 = arith.constant 0 : index
    %c0_6 = arith.constant 0 : index
    %6 = vector.load %arg4[%c0_5, %c0_6] : memref<32x128xf32, #tpu.memory_space<vmem>>, vector<32x128xf32>
    tpu.vector_store %arg4[%c0_5, %c0_6], %5 {strides = array<i32>} : memref<32x128xf32, #tpu.memory_space<vmem>>, vector<32x128xf32>,
    return
  }
  func.func @transform_0(%arg0: i32) -> (i32, i32) {
    %c0_i32 = arith.constant 0 : i32
    %c0_i32_0 = arith.constant 0 : i32
    return %arg0, %c0_i32 : i32, i32
  }
  func.func @transform_1(%arg0: i32) -> (i32, i32) {
    %c0_i32 = arith.constant 0 : i32
    %c0_i32_0 = arith.constant 0 : i32
    %c0_i32_1 = arith.constant 0 : i32
    return %c0_i32, %c0_i32_0 : i32, i32
  }
  func.func @transform_2(%arg0: i32) -> (i32, i32) {
    %c0_i32 = arith.constant 0 : i32
    %c0_i32_0 = arith.constant 0 : i32
    %c0_i32_1 = arith.constant 0 : i32
    return %c0_i32, %c0_i32_0 : i32, i32
  }
  func.func @transform_3(%arg0: i32) -> (i32, i32) {
    %c0_i32 = arith.constant 0 : i32
    %c0_i32_0 = arith.constant 0 : i32
    return %arg0, %c0_i32 : i32, i32
  }
}

</mosaic_0001>

<llo_original>
// kernel: tpu_custom_call.1
$region0: #{tpu_custom_call.1}
  #allocation0 [shape = 'u32[]', space=smem, size = 0x4, offset = 0x4, fixed_abs, tag = 'smem constant byte address 0x4 - core index']
  #allocation1 [shape = 'u32[72,128]{1,0:T(1,128)}', space=vmem, size = 0x9000, scoped, tag = 'internal scratch']
  %s0 = inlined_call_operand.hbm [shape: bf16[32,64], index: 0, kind: input, shape index: {}]
  %s1 = inlined_call_operand.hbm [shape: bf16[64,128], index: 1, kind: input, shape index: {}]
  %s2 = inlined_call_operand.vmem [shape: f32[1,128], index: 2, kind: input, shape index: {}]
  %s3 = inlined_call_operand.hbm [shape: f32[32,128], index: 3, kind: output, shape index: {}]
  %s4 = sld [smem:[#allocation0]]
  $region30: #{tpu_custom_call.1} parent=0
    _
  %s6 = ssub.s32 1, %s4
  %s7 = scalar_select 0, %s6, %s4
  $region1: #{tpu_custom_call.1} parent=0
    #allocation2 [shape = 'u8[8192]{0}', space=vmem, size = 0x2000, scoped, tag = 'input window, operand 0, single buffered']
    #allocation3 [shape = 's32[1]{0}', space=sflag, size = 0x4, scoped, tag = 'scoped memory for tpu_custom_call.1']
    #allocation4 [shape = 's32[1]{0}', space=sflag, size = 0x4, scoped, tag = 'scoped memory for tpu_custom_call.1']
    #allocation5 [shape = 'u8[16384]{0}', space=vmem, size = 0x4000, scoped, tag = 'input window, operand 1, single buffered']
    #allocation6 [shape = 's32[1]{0}', space=sflag, size = 0x4, scoped, tag = 'scoped memory for tpu_custom_call.1']
    #allocation7 [shape = 'u8[16384]{0}', space=vmem, size = 0x4000, scoped, tag = 'output window, operand 0, single buffered']
    %8 = vsyncpa [#allocation3], 0
    %9 = vsyncpa [#allocation6], 0
    %10 = vsyncpa [#allocation4], 0
    // Predicated region
    $region2: #{tpu_custom_call.1} parent=1 // pred_check
      _
    $region3: #{tpu_custom_call.1} parent=1 // pred_check_branch
      %12 = sbr.rel (0) target = $region5
    $region4: #{tpu_custom_call.1} parent=1 // pred_region
      %14 = vsyncadd [#allocation3], 0
      %s15 = sshll.u32 %s0, 4
      %s16 = int_to_ptr.hbm [resolvable:$true] %s15
      %s17 = sshll.u32 [#allocation2], 4
      %s18 = int_to_ptr.vmem [resolvable:$true] %s17
      %23 = dma.hbm_to_vmem [thread:$0]  %s16, 256, %s18, [#allocation3], 64, 64, 4
    $region5: #{tpu_custom_call.1} parent=1 // pred_fallthru
      _
    // Predicated region
    $region6: #{tpu_custom_call.1} parent=1 // pred_check
      _
    $region7: #{tpu_custom_call.1} parent=1 // pred_check_branch
      %25 = sbr.rel (0) target = $region9
    $region8: #{tpu_custom_call.1} parent=1 // pred_region
      %27 = vsyncadd [#allocation6], 0
      %s28 = sshll.u32 %s1, 4
      %s29 = int_to_ptr.hbm [resolvable:$true] %s28
      %s30 = sshll.u32 [#allocation5], 4
      %s31 = int_to_ptr.vmem [resolvable:$true] %s30
      %36 = dma.hbm_to_vmem [thread:$0]  %s29, 512, %s31, [#allocation6], 64, 64, 4
    $region9: #{tpu_custom_call.1} parent=1 // pred_fallthru
      _
    // Predicated region
    $region10: #{tpu_custom_call.1} parent=1 // pred_check
      _
    $region11: #{tpu_custom_call.1} parent=1 // pred_check_branch
      %38 = sbr.rel (0) target = $region13
    $region12: #{tpu_custom_call.1} parent=1 // pred_region
      _
    $region13: #{tpu_custom_call.1} parent=1 // pred_fallthru
      _
    // Predicated region
    $region14: #{tpu_custom_call.1} parent=1 // pred_check
      _
    $region15: #{tpu_custom_call.1} parent=1 // pred_check_branch
      %40 = sbr.rel (0) target = $region17
    $region16: #{tpu_custom_call.1} parent=1 // pred_region
      %42 = dma.done [#allocation3], 256
    $region17: #{tpu_custom_call.1} parent=1 // pred_fallthru
      _
    // Predicated region
    $region18: #{tpu_custom_call.1} parent=1 // pred_check
      _
    $region19: #{tpu_custom_call.1} parent=1 // pred_check_branch
      %44 = sbr.rel (0) target = $region21
    $region20: #{tpu_custom_call.1} parent=1 // pred_region
      %46 = dma.done [#allocation6], 512
    $region21: #{tpu_custom_call.1} parent=1 // pred_fallthru
      _
    %v48 = vld [vmem:[#allocation2] sm:$0xf]
    %v49 = vld [vmem:[#allocation2 + $0x4] sm:$0xf]
    %v50 = vld [vmem:[#allocation2 + $0x8] sm:$0xf]
    %v51 = vld [vmem:[#allocation2 + $0xc] sm:$0xf]
    %v52 = vld [vmem:[#allocation5] sm:$0xf]
    %v53 = vld [vmem:[#allocation5 + $0x4] sm:$0xf]
    %v54 = vld [vmem:[#allocation5 + $0x8] sm:$0xf]
    %v55 = vld [vmem:[#allocation5 + $0xc] sm:$0xf]
    %v56 = vld [vmem:[#allocation5 + $0x10] sm:$0xf]
    %v57 = vld [vmem:[#allocation5 + $0x14] sm:$0xf]
    %v58 = vld [vmem:[#allocation5 + $0x18] sm:$0xf]
    %v59 = vld [vmem:[#allocation5 + $0x1c] sm:$0xf]
    %v60 = vld [vmem:[%s2] sm:$0x1]
    %v62 = vperm.slane %v60, 0
    %v68 = vunpack.c.l.b16 %v48
    %v69 = vunpack.c.l.b16 %v49
    %v70 = vunpack.c.l.b16 %v50
    %v71 = vunpack.c.l.b16 %v51
    %v72 = vpack.c.b16 %v69, %v68
    %v73 = vpack.c.b16 %v71, %v70
    %v82 = vunpack.c.l.b16 %v52
    %v83 = vunpack.c.l.b16 %v53
    %v84 = vunpack.c.l.b16 %v54
    %v85 = vunpack.c.l.b16 %v55
    %v86 = vunpack.c.l.b16 %v56
    %v87 = vunpack.c.l.b16 %v57
    %v88 = vunpack.c.l.b16 %v58
    %v89 = vunpack.c.l.b16 %v59
    %v90 = vpack.c.b16 %v83, %v82
    %v91 = vpack.c.b16 %v85, %v84
    %v92 = vpack.c.b16 %v87, %v86
    %v93 = vpack.c.b16 %v89, %v88
    %vm98 = vcmask 523264
    %v100 = vsel %vm98, %v72, 0
    %v103 = vsel %vm98, %v73, 0
    %105 = vmatpush.bf16.msra.mxu0 0
    %106 = vmatpush.bf16.msra.mxu0 0
    %107 = vmatpush.bf16.msra.mxu0 0
    %108 = vmatpush.bf16.msra.mxu0 0
    %109 = vmatpush.bf16.msra.mxu0 %v93
    %110 = vmatpush.bf16.msra.mxu0 %v92
    %111 = vmatpush.bf16.msra.mxu0 %v91
    %112 = vmatpush.bf16.msra.mxu0 %v90
    %113 = vmatmul.bf16.gmra.mxu0 %v100
    %v114 = vpop.f32.mrf.mxu0
    %v115 = vadd.f32 %v62, %v114
    %v116 = vpop.f32.mrf.mxu0
    %v117 = vadd.f32 %v62, %v116
    %118 = vmatmul.bf16.gmra.mxu0 %v103
    %v119 = vpop.f32.mrf.mxu0
    %v120 = vadd.f32 %v62, %v119
    %v121 = vpop.f32.mrf.mxu0
    %v122 = vadd.f32 %v62, %v121
    %123 = vdwg.mxu0
    %124 = vst [vmem:[#allocation7] sm:$0xff] %v115
    %125 = vst [vmem:[#allocation7 + $0x8] sm:$0xff] %v117
    %126 = vst [vmem:[#allocation7 + $0x10] sm:$0xff] %v120
    %127 = vst [vmem:[#allocation7 + $0x18] sm:$0xff] %v122
    // Predicated region
    $region22: #{tpu_custom_call.1} parent=1 // pred_check
      _
    $region23: #{tpu_custom_call.1} parent=1 // pred_check_branch
      %129 = sbr.rel (0) target = $region25
    $region24: #{tpu_custom_call.1} parent=1 // pred_region
      %131 = vsyncadd [#allocation4], 0
      %s132 = sshll.u32 [#allocation7], 4
      %s133 = int_to_ptr.vmem [resolvable:$true] %s132
      %s134 = sshll.u32 %s3, 4
      %s135 = int_to_ptr.hbm [resolvable:$true] %s134
      %140 = dma.vmem_to_hbm [thread:$0]  %s133, 512, %s135, [#allocation4], 128, 128, 8
    $region25: #{tpu_custom_call.1} parent=1 // pred_fallthru
      _
    // Predicated region
    $region26: #{tpu_custom_call.1} parent=1 // pred_check
      _
    $region27: #{tpu_custom_call.1} parent=1 // pred_check_branch
      %142 = sbr.rel (0) target = $region29
    $region28: #{tpu_custom_call.1} parent=1 // pred_region
      %144 = dma.done [#allocation4], 512
    $region29: #{tpu_custom_call.1} parent=1 // pred_fallthru
      _
    %145 = vsyncpa [#allocation3], 1
    %146 = vsyncpa [#allocation6], 1
    %147 = vsyncpa [#allocation4], 1

</llo_original>
